<compile_context>
chip_gen: v7x
topology: tpu7x:2x2x1
jax: 0.10.0
libtpu: 0.0.40
codegen_flags: <defaults>
</compile_context>

<pallas_src>
import jax
import jax.numpy as jnp
from jax.experimental import pallas as pl
from jax.experimental.pallas import tpu as pltpu

# ------------------------- small, TPU-friendly test sizes -------------------------
BATCH = 8
INPUT_SIZE = 1536      # small stand-in for the real 103680
HIDDEN_SIZE = 500      # same as the original module (padded to 512 internally)
NUM_CLASSES = 2
# Small-test overrides so the grid exercises both axes (n_h=2, n_k=3) on any chip.
TEST_TH = 256
TEST_TK = 512


def _round_up(x, m):
    return ((x + m - 1) // m) * m


def _cdiv(a, b):
    return -(-a // b)


def _tpu_config():
    """Best-effort query of VMEM capacity + generation (falls back gracefully)."""
    vmem_bytes = 128 * 2**20
    try:
        vmem_bytes = int(pltpu.get_tpu_info().vmem_capacity_bytes)
    except Exception:
        pass
    kind = ""
    try:
        kind = jax.devices()[0].device_kind.lower()
    except Exception:
        pass
    is_v7 = ("v7" in kind) or (vmem_bytes <= 80 * 2**20)
    return vmem_bytes, is_v7


def mlp_kernel(x_ref, w1_ref, b1_ref, w2_ref, out_ref, h_acc):
    """Grid = (n_h, n_k).

    Axis 0 ("parallel") tiles the hidden dim; axis 1 ("arbitrary") tiles the
    fc1 reduction.  h_acc (f32 VMEM) accumulates x @ W1[:, h_tile] across K
    steps.  On the last K step we add b1, apply ReLU, and emit this H-tile's
    fc2 partial into its own output block (summed + biased in the wrapper).
    """
    k = pl.program_id(1)

    @pl.when(k == 0)
    def _():
        h_acc[...] = jnp.zeros_like(h_acc)

    # fc1 partial product for this (h, k) tile: bf16 operands, f32 accumulation (MXU).
    h_acc[...] += jnp.dot(x_ref[...], w1_ref[...],
                          preferred_element_type=jnp.float32)

    @pl.when(k == pl.num_programs(1) - 1)
    def _():
        h = jnp.maximum(h_acc[...] + b1_ref[...], 0.0)                  # bias + ReLU
        part = jnp.dot(h, w2_ref[...], preferred_element_type=jnp.float32)
        out_ref[...] = part[None, :, :].astype(out_ref.dtype)           # (1, B, C)


def prepare_params(w1, b1, w2, b2, batch, *, stream_dtype=jnp.bfloat16,
                   th=None, tk=None):
    """ONE-TIME (init-time) pad / cast / pre-block of the weights + config.

    w1: (IN, H), b1: (H,), w2: (H, C), b2: (C,) -- stored (in, out) vs torch.
    Returns (params, cfg) to be reused across forward calls.
    """
    IN, H = w1.shape
    Hw, C = w2.shape
    assert H == Hw and b1.shape == (H,) and b2.shape == (C,)

    vmem_bytes, is_v7 = _tpu_config()
    elem = jnp.dtype(stream_dtype).itemsize

    # ---- hidden tiling: single H tile on single-TC v5e/v6e, 2 tiles on v7x ----
    if th is None:
        H_pad = _round_up(H, 128)
        n_h = 2 if (is_v7 and H_pad % 256 == 0) else 1
        th = H_pad // n_h
    else:
        assert th % 128 == 0
        H_pad = _round_up(H, th)
        n_h = H_pad // th

    # ---- K tiling: pad IN to a multiple of 512, then the fewest K steps whose
    # double-buffered streamed operands fit a per-generation VMEM budget ----
    K_ALIGN = 512
    m = _cdiv(IN, K_ALIGN)                        # IN in units of 512
    per_k = 2 * (batch + th) * elem               # double-buffered x + W1 per unit of K
    resident = (th * 4 + th * C * 4 + batch * th * 4   # b1 tile, W2 tile, f32 scratch
                + 2 * batch * C * 4)                    # double-buffered output block
    budget = int(0.70 * vmem_bytes)               # ~90 MiB on v5e/v6e, ~45 MiB on v7x
    if tk is None:
        n_k = 1
        while n_k < m and _cdiv(m, n_k) * K_ALIGN * per_k + resident > budget:
            n_k += 1
        tk = _cdiv(m, n_k) * K_ALIGN
    else:
        assert tk % 128 == 0
    n_k = _cdiv(IN, tk)
    IN_pad = n_k * tk                             # <= IN + 512*n_k of pure-zero rows

    est = tk * per_k + resident
    cap = (52 if is_v7 else 100) * 2**20
    vmem_limit = int(min(cap, max(32 * 2**20, est + 8 * 2**20)))

    # ---- one-time pad / cast / pre-block of the weights (zeros are exact no-ops) ----
    w1_p = jnp.pad(w1, ((0, IN_pad - IN), (0, H_pad - H))).astype(stream_dtype)
    # (IN_pad, n_h*th) -> (n_h, IN_pad, th): each H half is fully contiguous in HBM.
    w1_blocked = w1_p.reshape(IN_pad, n_h, th).transpose(1, 0, 2)
    b1_p = jnp.pad(b1, (0, H_pad - H)).reshape(1, H_pad).astype(jnp.float32)
    w2_p = jnp.pad(w2, ((0, H_pad - H), (0, 0))).astype(jnp.float32)
    b2_p = b2.astype(jnp.float32)

    params = (jax.device_put(w1_blocked), jax.device_put(b1_p),
              jax.device_put(w2_p), jax.device_put(b2_p))
    cfg = dict(B=batch, IN=IN, IN_pad=IN_pad, C=C, H_pad=H_pad,
               th=th, tk=tk, n_h=n_h, n_k=n_k,
               stream_dtype=stream_dtype, vmem_limit=vmem_limit)
    return params, cfg


def neural_net_forward(x, params, cfg):
    """x: (B, IN) f32.  params/cfg from prepare_params (weights pre-blocked)."""
    w1_blocked, b1_p, w2_p, b2_p = params
    B, IN = x.shape
    assert B == cfg["B"] and IN == cfg["IN"]
    tk, th, n_h, n_k = cfg["tk"], cfg["th"], cfg["n_h"], cfg["n_k"]
    C, IN_pad = cfg["C"], cfg["IN_pad"]

    # Per-call work on x only (tiny vs. W1's ~100 MB): pad K and cast to bf16.
    if IN_pad != IN:
        x = jnp.pad(x, ((0, 0), (0, IN_pad - IN)))
    x_p = x.astype(cfg["stream_dtype"])

    # TODO(synk): if an xprof trace on v5e shows exposed DMA waits at K-step
    # boundaries, add pipeline_mode=pl.Buffered(3) to the x / W1 in_specs
    # (VMEM there is 128 MiB, so a third buffer is affordable).
    partial = pl.pallas_call(
        mlp_kernel,
        out_shape=jax.ShapeDtypeStruct((n_h, B, C), jnp.float32),
        grid_spec=pltpu.PrefetchScalarGridSpec(
            num_scalar_prefetch=0,
            grid=(n_h, n_k),
            in_specs=[
                pl.BlockSpec((B, tk), lambda h, k: (0, k)),              # x K-tile (bf16)
                pl.BlockSpec((pl.Squeezed(), tk, th),                    # pre-blocked W1
                             lambda h, k: (h, k, 0)),                    #   -> (tk, th)
                pl.BlockSpec((1, th), lambda h, k: (0, h)),              # b1 (resident)
                pl.BlockSpec((th, C), lambda h, k: (h, 0)),              # W2 (resident)
            ],
            out_specs=pl.BlockSpec((1, B, C), lambda h, k: (h, 0, 0)),
            scratch_shapes=[pltpu.VMEM((B, th), jnp.float32)],
        ),
        compiler_params=pltpu.CompilerParams(
            dimension_semantics=("parallel", "arbitrary"),
            vmem_limit_bytes=cfg["vmem_limit"],
        ),
    )(x_p, w1_blocked, b1_p, w2_p)

    # Sum the per-H-tile fc2 partials (exact: ReLU precedes this reduction) and
    # add the fc2 bias exactly once.  Tiny op: (n_h, B, 2).
    return partial.sum(axis=0) + b2_p.reshape(1, C)


def init_params(key, in_size, hidden, classes):
    """Deterministic init mimicking PyTorch nn.Linear (uniform +-1/sqrt(fan_in))."""
    k1, k2, k3, k4 = jax.random.split(key, 4)
    bound1 = 1.0 / (in_size ** 0.5)
    bound2 = 1.0 / (hidden ** 0.5)
    # Stored as (in, out) so the kernel does x @ W (equivalent to torch's x @ W.T).
    w1 = jax.random.uniform(k1, (in_size, hidden), jnp.float32, -bound1, bound1)
    b1 = jax.random.uniform(k2, (hidden,), jnp.float32, -bound1, bound1)
    w2 = jax.random.uniform(k3, (hidden, classes), jnp.float32, -bound2, bound2)
    b2 = jax.random.uniform(k4, (classes,), jnp.float32, -bound2, bound2)
    return w1, b1, w2, b2


if __name__ == "__main__":
    key = jax.random.PRNGKey(0)
    kx, kp = jax.random.split(key)

    x = jax.random.normal(kx, (BATCH, INPUT_SIZE), jnp.float32)
    w1, b1, w2, b2 = init_params(kp, INPUT_SIZE, HIDDEN_SIZE, NUM_CLASSES)

    # Small-size test: force th/tk so the grid is (n_h=2, n_k=3) on any chip,
    # exercising both the K accumulator and the H-partial summation paths.
    # At the real size (IN=103680) leave th/tk as None for per-generation auto-config.
    params, cfg = prepare_params(w1, b1, w2, b2, BATCH, th=TEST_TH, tk=TEST_TK)

    out = jax.block_until_ready(neural_net_forward(x, params, cfg))

    # Pure-JAX reference with the same bf16 rounding applied to the streamed
    # operands (accumulation stays f32 in both paths).
    xr = x.astype(jnp.bfloat16).astype(jnp.float32)
    w1r = w1.astype(jnp.bfloat16).astype(jnp.float32)
    ref = jnp.maximum(xr @ w1r + b1, 0.0) @ w2 + b2

    assert out.shape == (BATCH, NUM_CLASSES)
    assert jnp.allclose(out, ref, atol=2e-3, rtol=2e-3)

    print("KERNEL_OK")
</pallas_src>

<mosaic_0001>
module attributes {stable_mosaic.version = 11 : i64} {
  func.func @mlp_kernel(%arg0: i32, %arg1: i32, %arg2: memref<8x512xbf16, #tpu.memory_space<vmem>>, %arg3: memref<1x512x256xbf16, #tpu.memory_space<vmem>>, %arg4: memref<1x256xf32, #tpu.memory_space<vmem>>, %arg5: memref<256x2xf32, #tpu.memory_space<vmem>>, %arg6: memref<1x8x2xf32, #tpu.memory_space<vmem>>, %arg7: memref<8x256xf32, #tpu.memory_space<vmem>>) attributes {dimension_semantics = [#tpu.dimension_semantics<parallel>, #tpu.dimension_semantics<arbitrary>], iteration_bounds = array<i64: 2, 3>, scalar_prefetch = 0 : i64, scratch_operands = 1 : i64, tpu.core_type = #tpu.core_type<tc>, window_params = [{transform_indices = @transform_0, window_bounds = array<i64: 8, 512>}, {transform_indices = @transform_1, window_bounds = array<i64: 1, 512, 256>}, {transform_indices = @transform_2, window_bounds = array<i64: 1, 256>}, {transform_indices = @transform_3, window_bounds = array<i64: 256, 2>}, {transform_indices = @transform_4, window_bounds = array<i64: 1, 8, 2>}]} {
    %c0_i32 = arith.constant 0 : i32
    %0 = arith.cmpi eq, %arg1, %c0_i32 : i32
    %1 = arith.extui %0 : i1 to i32
    %c0_i32_0 = arith.constant 0 : i32
    %2 = arith.cmpi ne, %1, %c0_i32_0 : i32
    scf.if %2 {
      %cst_10 = arith.constant 0.000000e+00 : f32
      %13 = vector.broadcast %cst_10 : f32 to vector<8x256xf32>
      %c0_11 = arith.constant 0 : index
      %c0_12 = arith.constant 0 : index
      %14 = vector.load %arg7[%c0_11, %c0_12] : memref<8x256xf32, #tpu.memory_space<vmem>>, vector<8x256xf32>
      tpu.vector_store %arg7[%c0_11, %c0_12], %13 {strides = array<i32>} : memref<8x256xf32, #tpu.memory_space<vmem>>, vector<8x256xf32>,
    } else {
    }
    %c0 = arith.constant 0 : index
    %c0_1 = arith.constant 0 : index
    %3 = vector.load %arg7[%c0, %c0_1] : memref<8x256xf32, #tpu.memory_space<vmem>>, vector<8x256xf32>
    %c0_2 = arith.constant 0 : index
    %c0_3 = arith.constant 0 : index
    %4 = vector.load %arg2[%c0_2, %c0_3] : memref<8x512xbf16, #tpu.memory_space<vmem>>, vector<8x512xbf16>
    %c0_4 = arith.constant 0 : index
    %c0_5 = arith.constant 0 : index
    %c0_6 = arith.constant 0 : index
    %5 = vector.load %arg3[%c0_4, %c0_5, %c0_6] : memref<1x512x256xbf16, #tpu.memory_space<vmem>>, vector<1x512x256xbf16>
    %6 = vector.shape_cast %5 : vector<1x512x256xbf16> to vector<512x256xbf16>
    %cst = arith.constant dense<0.000000e+00> : vector<8x256xf32>
    %7 = tpu.matmul %4, %6, %cst {dimension_numbers = #tpu.dot_dimension_numbers<[1], [0], [0], [1], [0, 0, 1, 1], [], []>} : vector<8x512xbf16>, vector<512x256xbf16>, vector<8x256xf32> -> vector<8x256xf32>
    %8 = arith.addf %3, %7 : vector<8x256xf32>
    %c0_7 = arith.constant 0 : index
    %c0_8 = arith.constant 0 : index
    %9 = vector.load %arg7[%c0_7, %c0_8] : memref<8x256xf32, #tpu.memory_space<vmem>>, vector<8x256xf32>
    tpu.vector_store %arg7[%c0_7, %c0_8], %8 {strides = array<i32>} : memref<8x256xf32, #tpu.memory_space<vmem>>, vector<8x256xf32>,
    %c2_i32 = arith.constant 2 : i32
    %10 = arith.cmpi eq, %arg1, %c2_i32 : i32
    %11 = arith.extui %10 : i1 to i32
    %c0_i32_9 = arith.constant 0 : i32
    %12 = arith.cmpi ne, %11, %c0_i32_9 : i32
    scf.if %12 {
      %c0_10 = arith.constant 0 : index
      %c0_11 = arith.constant 0 : index
      %13 = vector.load %arg7[%c0_10, %c0_11] : memref<8x256xf32, #tpu.memory_space<vmem>>, vector<8x256xf32>
      %c0_12 = arith.constant 0 : index
      %c0_13 = arith.constant 0 : index
      %14 = vector.load %arg4[%c0_12, %c0_13] : memref<1x256xf32, #tpu.memory_space<vmem>>, vector<1x256xf32>
      %15 = vector.broadcast %14 : vector<1x256xf32> to vector<8x256xf32>
      %16 = arith.addf %13, %15 : vector<8x256xf32>
      %cst_14 = arith.constant 0.000000e+00 : f32
      %17 = vector.broadcast %cst_14 : f32 to vector<8x256xf32>
      %18 = arith.maximumf %16, %17 : vector<8x256xf32>
      %c0_15 = arith.constant 0 : index
      %c0_16 = arith.constant 0 : index
      %19 = vector.load %arg5[%c0_15, %c0_16] : memref<256x2xf32, #tpu.memory_space<vmem>>, vector<256x2xf32>
      %cst_17 = arith.constant dense<0.000000e+00> : vector<8x2xf32>
      %20 = tpu.matmul %18, %19, %cst_17 {dimension_numbers = #tpu.dot_dimension_numbers<[1], [0], [0], [1], [0, 0, 1, 1], [], []>} : vector<8x256xf32>, vector<256x2xf32>, vector<8x2xf32> -> vector<8x2xf32>
      %21 = vector.shape_cast %20 : vector<8x2xf32> to vector<1x8x2xf32>
      %c0_18 = arith.constant 0 : index
      %c0_19 = arith.constant 0 : index
      %c0_20 = arith.constant 0 : index
      %22 = vector.load %arg6[%c0_18, %c0_19, %c0_20] : memref<1x8x2xf32, #tpu.memory_space<vmem>>, vector<1x8x2xf32>
      tpu.vector_store %arg6[%c0_18, %c0_19, %c0_20], %21 {strides = array<i32>} : memref<1x8x2xf32, #tpu.memory_space<vmem>>, vector<1x8x2xf32>,
    } else {
    }
    return
  }
  func.func @transform_0(%arg0: i32, %arg1: i32) -> (i32, i32) {
    %c0_i32 = arith.constant 0 : i32
    %c0_i32_0 = arith.constant 0 : i32
    return %c0_i32, %arg1 : i32, i32
  }
  func.func @transform_1(%arg0: i32, %arg1: i32) -> (i32, i32, i32) {
    %c0_i32 = arith.constant 0 : i32
    %c0_i32_0 = arith.constant 0 : i32
    return %arg0, %arg1, %c0_i32 : i32, i32, i32
  }
  func.func @transform_2(%arg0: i32, %arg1: i32) -> (i32, i32) {
    %c0_i32 = arith.constant 0 : i32
    %c0_i32_0 = arith.constant 0 : i32
    return %c0_i32, %arg0 : i32, i32
  }
  func.func @transform_3(%arg0: i32, %arg1: i32) -> (i32, i32) {
    %c0_i32 = arith.constant 0 : i32
    %c0_i32_0 = arith.constant 0 : i32
    return %arg0, %c0_i32 : i32, i32
  }
  func.func @transform_4(%arg0: i32, %arg1: i32) -> (i32, i32, i32) {
    %c0_i32 = arith.constant 0 : i32
    %c0_i32_0 = arith.constant 0 : i32
    %c0_i32_1 = arith.constant 0 : i32
    return %arg0, %c0_i32, %c0_i32_0 : i32, i32, i32
  }
}

</mosaic_0001>

<llo_original>
// kernel: tpu_custom_call.1
$region0: #{tpu_custom_call.1}
  #allocation0 [shape = 'u32[]', space=smem, size = 0x4, offset = 0x4, fixed_abs, tag = 'smem constant byte address 0x4 - core index']
  #allocation1 [shape = 'u32[144,128]{1,0:T(1,128)}', space=vmem, size = 0x12000, scoped, tag = 'internal scratch']
  #allocation2 [shape = 'f32[8,256]{1,0:T(8,128)}', space=vmem, size = 0x2000, scoped, tag = 'scratch operand']
  %s0 = inlined_call_operand.hbm [shape: bf16[8,1536], index: 0, kind: input, shape index: {}]
  %s1 = inlined_call_operand.hbm [shape: bf16[2,1536,256], index: 1, kind: input, shape index: {}]
  %s2 = inlined_call_operand.hbm [shape: f32[1,512], index: 2, kind: input, shape index: {}]
  %s3 = inlined_call_operand.vmem [shape: f32[512,2], index: 3, kind: input, shape index: {}]
  %s4 = inlined_call_operand.vmem [shape: f32[2,8,2], index: 4, kind: output, shape index: {}]
  %s5 = sld [smem:[#allocation0]]
  $region69: #{tpu_custom_call.1} parent=0
    _
  %s7 = ssub.s32 1, %s5
  %s8 = scalar_select 0, %s7, %s5
  $region1: #{tpu_custom_call.1} parent=0
    #allocation3 [shape = 'u8[16384]{0}', space=vmem, size = 0x4000, scoped, tag = 'input window, operand 0']
    #allocation4 [shape = 's32[2]{0}', space=sflag, size = 0x8, scoped, tag = 'scoped memory for tpu_custom_call.1']
    #allocation5 [shape = 'u8[524288]{0}', space=vmem, size = 0x80000, scoped, tag = 'input window, operand 1']
    #allocation6 [shape = 's32[2]{0}', space=sflag, size = 0x8, scoped, tag = 'scoped memory for tpu_custom_call.1']
    #allocation7 [shape = 'u8[2048]{0}', space=vmem, size = 0x800, scoped, tag = 'input window, operand 2']
    %9 = vsyncpa [#allocation4], 0
    %s10 = scalar_lea.sflag [#allocation4], 1
    %11 = vsyncpa %s10, 0
    %12 = vsyncpa [#allocation6], 0
    %s13 = scalar_lea.sflag [#allocation6], 1
    %14 = vsyncpa %s13, 0
    loop: start=0, step=1, limit=8
    $region2: #{tpu_custom_call.1} parent=1 // loop_pre_header
      _
    $region3: #{tpu_custom_call.1} parent=1 // loop_header
      %s16 = sphi 0, %s20
      %p17 = scmp.ge.s32.totalorder %s16, 8
      %s23 = sphi 0, %s35
      %s24 = sphi 0, %s31
      %s25 = sphi 0, %s23
      %s26 = sphi 0, %s24
      %s27 = sphi 0, %s25
      %s28 = sphi 0, %s26
      %s38 = sphi 0, %s40
      %s41 = sphi 0, %s38
      %s42 = sphi 0, %s41
      %s58 = sphi 0, %s42
      %s66 = sphi 0, %s68
      %s69 = sphi 0, %s66
      %s70 = sphi 0, %s69
      %s86 = sphi 0, %s70
      %s92 = sphi 0, %s94
      %s95 = sphi 0, %s92
      %s96 = sphi 0, %s95
      %s112 = sphi 0, %s96
      %s118 = sphi 0, %s120
      %s121 = sphi 0, %s118
      %s122 = sphi 0, %s121
      %s138 = sphi 0, %s122
      %s144 = sphi 0, %s146
      %s147 = sphi 0, %s144
      %s148 = sphi 0, %s147
      %s164 = sphi 0, %s148
    $region4: #{tpu_custom_call.1} parent=1 // loop_header_branch
      %19 = sbr.rel (%p17) target = $region8
    $region5: #{tpu_custom_call.1} parent=1 // loop_body
      %s21 = ssub.s32 %s16, 1
      %s22 = ssub.s32 %s16, 2
      %s29 = sadd.s32 1, %s24
      %p30 = scmp.ge.s32.totalorder %s29, 3
      %s31 = scalar_select %p30, 0, %s29
      %s32 = sadd.s32 1, %s23
      %s33 = scalar_select %p30, %s32, %s23
      %p34 = scmp.ge.s32.totalorder %s33, 2
      %s35 = scalar_select %p34, 0, %s33
      %s36 = ssub.s32 %s24, %s31
      %p37 = scmp.eq.s32.totalorder %s36, 0
      %s39 = sadd.s32 %s38, 1
      %s40 = scalar_select %p37, %s38, %s39
      %p43 = pneg %p37
      %p44 = scmp.eq.s32.totalorder %s16, 5
      %p45 = por %p43, %p44
      %p46 = scmp.ne.s32.totalorder %s38, %s41
      %p47 = scmp.eq.s32.totalorder %s16, 0
      %p48 = por %p46, %p47
      %p49 = scmp.ne.s32.totalorder %s38, %s41
      %p50 = scmp.eq.s32.totalorder %s21, 5
      %p51 = por %p49, %p50
      %p52 = scmp.ne.s32.totalorder %s41, %s42
      %p53 = scmp.eq.s32.totalorder %s21, 0
      %p54 = por %p52, %p53
      %p55 = scmp.ne.s32.totalorder %s41, %s42
      %p56 = scmp.eq.s32.totalorder %s22, 5
      %p57 = por %p55, %p56
      %p59 = scmp.ne.s32.totalorder %s42, %s58
      %p60 = scmp.eq.s32.totalorder %s22, 0
      %p61 = por %p59, %p60
      %s62 = ssub.s32 %s23, %s35
      %s63 = ssub.s32 %s24, %s31
      %s64 = sor.u32 %s62, %s63
      %p65 = scmp.eq.s32.totalorder %s64, 0
      %s67 = sadd.s32 %s66, 1
      %s68 = scalar_select %p65, %s66, %s67
      %p71 = pneg %p65
      %p72 = scmp.eq.s32.totalorder %s16, 5
      %p73 = por %p71, %p72
      %p74 = scmp.ne.s32.totalorder %s66, %s69
      %p75 = scmp.eq.s32.totalorder %s16, 0
      %p76 = por %p74, %p75
      %p77 = scmp.ne.s32.totalorder %s66, %s69
      %p78 = scmp.eq.s32.totalorder %s21, 5
      %p79 = por %p77, %p78
      %p80 = scmp.ne.s32.totalorder %s69, %s70
      %p81 = scmp.eq.s32.totalorder %s21, 0
      %p82 = por %p80, %p81
      %p83 = scmp.ne.s32.totalorder %s69, %s70
      %p84 = scmp.eq.s32.totalorder %s22, 5
      %p85 = por %p83, %p84
      %p87 = scmp.ne.s32.totalorder %s70, %s86
      %p88 = scmp.eq.s32.totalorder %s22, 0
      %p89 = por %p87, %p88
      %s90 = ssub.s32 %s23, %s35
      %p91 = scmp.eq.s32.totalorder %s90, 0
      %s93 = sadd.s32 %s92, 1
      %s94 = scalar_select %p91, %s92, %s93
      %p97 = pneg %p91
      %p98 = scmp.eq.s32.totalorder %s16, 5
      %p99 = por %p97, %p98
      %p100 = scmp.ne.s32.totalorder %s92, %s95
      %p101 = scmp.eq.s32.totalorder %s16, 0
      %p102 = por %p100, %p101
      %p103 = scmp.ne.s32.totalorder %s92, %s95
      %p104 = scmp.eq.s32.totalorder %s21, 5
      %p105 = por %p103, %p104
      %p106 = scmp.ne.s32.totalorder %s95, %s96
      %p107 = scmp.eq.s32.totalorder %s21, 0
      %p108 = por %p106, %p107
      %p109 = scmp.ne.s32.totalorder %s95, %s96
      %p110 = scmp.eq.s32.totalorder %s22, 5
      %p111 = por %p109, %p110
      %p113 = scmp.ne.s32.totalorder %s96, %s112
      %p114 = scmp.eq.s32.totalorder %s22, 0
      %p115 = por %p113, %p114
      %s116 = ssub.s32 %s23, %s35
      %p117 = scmp.eq.s32.totalorder %s116, 0
      %s119 = sadd.s32 %s118, 1
      %s120 = scalar_select %p117, %s118, %s119
      %p123 = pneg %p117
      %p124 = scmp.eq.s32.totalorder %s16, 5
      %p125 = por %p123, %p124
      %p126 = scmp.ne.s32.totalorder %s118, %s121
      %p127 = scmp.eq.s32.totalorder %s16, 0
      %p128 = por %p126, %p127
      %p129 = scmp.ne.s32.totalorder %s118, %s121
      %p130 = scmp.eq.s32.totalorder %s21, 5
      %p131 = por %p129, %p130
      %p132 = scmp.ne.s32.totalorder %s121, %s122
      %p133 = scmp.eq.s32.totalorder %s21, 0
      %p134 = por %p132, %p133
      %p135 = scmp.ne.s32.totalorder %s121, %s122
      %p136 = scmp.eq.s32.totalorder %s22, 5
      %p137 = por %p135, %p136
      %p139 = scmp.ne.s32.totalorder %s122, %s138
      %p140 = scmp.eq.s32.totalorder %s22, 0
      %p141 = por %p139, %p140
      %s142 = ssub.s32 %s23, %s35
      %p143 = scmp.eq.s32.totalorder %s142, 0
      %s145 = sadd.s32 %s144, 1
      %s146 = scalar_select %p143, %s144, %s145
      %p149 = pneg %p143
      %p150 = scmp.eq.s32.totalorder %s16, 5
      %p151 = por %p149, %p150
      %p152 = scmp.ne.s32.totalorder %s144, %s147
      %p153 = scmp.eq.s32.totalorder %s16, 0
      %p154 = por %p152, %p153
      %p155 = scmp.ne.s32.totalorder %s144, %s147
      %p156 = scmp.eq.s32.totalorder %s21, 5
      %p157 = por %p155, %p156
      %p158 = scmp.ne.s32.totalorder %s147, %s148
      %p159 = scmp.eq.s32.totalorder %s21, 0
      %p160 = por %p158, %p159
      %p161 = scmp.ne.s32.totalorder %s147, %s148
      %p162 = scmp.eq.s32.totalorder %s22, 5
      %p163 = por %p161, %p162
      %p165 = scmp.ne.s32.totalorder %s148, %s164
      %p166 = scmp.eq.s32.totalorder %s22, 0
      %p167 = por %p165, %p166
      %p168 = scmp.le.s32.totalorder 1, %s16
      %p169 = scmp.lt.s32.totalorder %s16, 7
      %p170 = pnand %p168, %p169
      %p171 = pneg %p170
      // Predicated region
      $region9: #{tpu_custom_call.1} parent=5 // pred_check
        _
      $region10: #{tpu_custom_call.1} parent=5 // pred_check_branch
        %173 = sbr.rel (%p170) target = $region12
      $region11: #{tpu_custom_call.1} parent=5 // pred_region
        %s174 = ssub.s32 %s16, 1
      $region12: #{tpu_custom_call.1} parent=5 // pred_fallthru
        _
      %p175 = scmp.lt.s32.totalorder %s16, 6
      // Predicated region
      $region13: #{tpu_custom_call.1} parent=5 // pred_check
        %p176 = pneg %p175
      $region14: #{tpu_custom_call.1} parent=5 // pred_check_branch
        %178 = sbr.rel (%p176) target = $region16
      $region15: #{tpu_custom_call.1} parent=5 // pred_region
        // Predicated region
        $region17: #{tpu_custom_call.1} parent=15 // pred_check
          %p179 = pneg %p48
        $region18: #{tpu_custom_call.1} parent=15 // pred_check_branch
          %181 = sbr.rel (%p179) target = $region20
        $region19: #{tpu_custom_call.1} parent=15 // pred_region
          %s182 = sand.u32 %s38, 1
          %s183 = scalar_lea.sflag [#allocation4], %s182
          %s184 = sand.u32 %s38, 1
          %s185 = smul.addr %s184, 16
          %s186 = scalar_lea.vmem [#allocation3], %s185
          %s187 = smul.u32 4, %s24
          %s189 = ssub.s32 256, 256
          %190 = vsyncadd %s183, %s189
          %s191 = smul.addr %s187, 64
          %s192 = scalar_lea.hbm %s0, %s191
          %s194 = sshll.u32 %s186, 4
          %s195 = int_to_ptr.vmem [resolvable:$true] %s194
          %197 = dma.hbm_to_vmem [thread:$0]  %s192, 256, %s195, %s183
        $region20: #{tpu_custom_call.1} parent=15 // pred_fallthru
          _
        // Predicated region
        $region21: #{tpu_custom_call.1} parent=15 // pred_check
          %p198 = pneg %p76
        $region22: #{tpu_custom_call.1} parent=15 // pred_check_branch
          %200 = sbr.rel (%p198) target = $region24
        $region23: #{tpu_custom_call.1} parent=15 // pred_region
          %s201 = sand.u32 %s16, 1
          %s202 = scalar_lea.sflag [#allocation6], %s201
          %s203 = sand.u32 %s66, 1
          %s204 = smul.addr %s203, 512
          %s205 = scalar_lea.vmem [#allocation5], %s204
          %s206 = smul.u32 64, %s24
          %s208 = ssub.s32 8192, 8192
          %209 = vsyncadd %s202, %s208
          %s210 = smul.addr %s206, 2
          %s211 = smul.addr %s23, 384
          %s212 = sadd.s32 %s210, %s211
          %s213 = smul.addr %s212, 64
          %s214 = scalar_lea.hbm %s1, %s213
          %s215 = sshll.u32 %s205, 4
          %s216 = int_to_ptr.vmem [resolvable:$true] %s215
          %221 = dma.hbm_to_vmem [thread:$0]  %s214, 8192, %s216, %s202, 128, 128, 8
        $region24: #{tpu_custom_call.1} parent=15 // pred_fallthru
          _
        // Predicated region
        $region25: #{tpu_custom_call.1} parent=15 // pred_check
          %p222 = pneg %p102
        $region26: #{tpu_custom_call.1} parent=15 // pred_check_branch
          %224 = sbr.rel (%p222) target = $region28
        $region27: #{tpu_custom_call.1} parent=15 // pred_region
          %s225 = sand.u32 %s16, 1
          %s226 = scalar_lea.sflag [#allocation6], %s225
          %s227 = sand.u32 %s92, 1
          %s228 = smul.addr %s227, 2
          %s229 = scalar_lea.vmem [#allocation7], %s228
          %s230 = smul.u32 2, %s23
          %s232 = ssub.s32 32, 32
          %233 = vsyncadd %s226, %s232
          %s234 = smul.addr %s230, 16
          %s235 = scalar_lea.hbm %s2, %s234
          %s237 = sshll.u32 %s229, 4
          %s238 = int_to_ptr.vmem [resolvable:$true] %s237
          %240 = dma.hbm_to_vmem [thread:$0]  %s235, 32, %s238, %s226
        $region28: #{tpu_custom_call.1} parent=15 // pred_fallthru
          _
        // Predicated region
        $region29: #{tpu_custom_call.1} parent=15 // pred_check
          %p241 = pneg %p128
        $region30: #{tpu_custom_call.1} parent=15 // pred_check_branch
          %243 = sbr.rel (%p241) target = $region32
        $region31: #{tpu_custom_call.1} parent=15 // pred_region
          %s244 = smul.u32 32, %s23
          %p245 = scmp.lt.s32.totalorder %s244, 63
          %s246 = scalar_select %p245, %s244, 63
          %s247 = smul.addr %s246, 8
          %s248 = scalar_lea.vmem %s3, %s247
          %s249 = smul.u32 32, %s23
        $region32: #{tpu_custom_call.1} parent=15 // pred_fallthru
          _
      $region16: #{tpu_custom_call.1} parent=5 // pred_fallthru
        _
      %p250 = scmp.le.s32.totalorder 1, %s16
      %p251 = scmp.lt.s32.totalorder %s16, 7
      %p252 = pnand %p250, %p251
      %p253 = pneg %p252
      // Predicated region
      $region33: #{tpu_custom_call.1} parent=5 // pred_check
        _
      $region34: #{tpu_custom_call.1} parent=5 // pred_check_branch
        %255 = sbr.rel (%p252) target = $region36
      $region35: #{tpu_custom_call.1} parent=5 // pred_region
        %s256 = ssub.s32 %s16, 1
        %s257 = sand.u32 %s41, 1
        %s258 = scalar_lea.sflag [#allocation4], %s257
        %s259 = sand.u32 %s41, 1
        %s260 = smul.addr %s259, 16
        %s261 = scalar_lea.vmem [#allocation3], %s260
        // Predicated region
        $region37: #{tpu_custom_call.1} parent=35 // pred_check
          %p262 = pneg %p54
        $region38: #{tpu_custom_call.1} parent=35 // pred_check_branch
          %264 = sbr.rel (%p262) target = $region40
        $region39: #{tpu_custom_call.1} parent=35 // pred_region
          %265 = dma.done %s258, 256
        $region40: #{tpu_custom_call.1} parent=35 // pred_fallthru
          _
        %s266 = sand.u32 %s21, 1
        %s267 = scalar_lea.sflag [#allocation6], %s266
        %s268 = sand.u32 %s69, 1
        %s269 = smul.addr %s268, 512
        %s270 = scalar_lea.vmem [#allocation5], %s269
        // Predicated region
        $region41: #{tpu_custom_call.1} parent=35 // pred_check
          %p271 = pneg %p82
        $region42: #{tpu_custom_call.1} parent=35 // pred_check_branch
          %273 = sbr.rel (%p271) target = $region44
        $region43: #{tpu_custom_call.1} parent=35 // pred_region
          %274 = dma.done %s267, 8192
        $region44: #{tpu_custom_call.1} parent=35 // pred_fallthru
          _
        %s275 = sand.u32 %s21, 1
        %s276 = scalar_lea.sflag [#allocation6], %s275
        %s277 = sand.u32 %s95, 1
        %s278 = smul.addr %s277, 2
        %s279 = scalar_lea.vmem [#allocation7], %s278
        // Predicated region
        $region45: #{tpu_custom_call.1} parent=35 // pred_check
          %p280 = pneg %p108
        $region46: #{tpu_custom_call.1} parent=35 // pred_check_branch
          %282 = sbr.rel (%p280) target = $region48
        $region47: #{tpu_custom_call.1} parent=35 // pred_region
          %283 = dma.done %s276, 32
        $region48: #{tpu_custom_call.1} parent=35 // pred_fallthru
          _
        %s284 = sand.u32 %s41, 1
        %s285 = scalar_lea.sflag [#allocation4], %s284
        %s286 = sand.u32 %s41, 1
        %s287 = smul.addr %s286, 16
        %s288 = scalar_lea.vmem [#allocation3], %s287
        %p289 = pneg %p54
        %p290 = pneg %p51
        %s291 = sand.u32 %s21, 1
        %s292 = scalar_lea.sflag [#allocation6], %s291
        %s293 = sand.u32 %s69, 1
        %s294 = smul.addr %s293, 512
        %s295 = scalar_lea.vmem [#allocation5], %s294
        %p296 = pneg %p82
        %p297 = pneg %p79
        %s298 = sand.u32 %s21, 1
        %s299 = scalar_lea.sflag [#allocation6], %s298
        %s300 = sand.u32 %s95, 1
        %s301 = smul.addr %s300, 2
        %s302 = scalar_lea.vmem [#allocation7], %s301
        %p303 = pneg %p108
        %p304 = pneg %p105
        %s305 = smul.u32 32, %s25
        %p306 = scmp.lt.s32.totalorder %s305, 63
        %s307 = scalar_select %p306, %s305, 63
        %s308 = smul.addr %s307, 8
        %s309 = scalar_lea.vmem %s3, %s308
        %p310 = pneg %p134
        %p311 = pneg %p131
        %p312 = pneg %p160
        %p313 = pneg %p157
        %p314 = scmp.lt.s32.totalorder %s25, 1
        %s315 = scalar_select %p314, %s25, 1
        %s316 = smul.addr %s315, 8
        %s317 = scalar_lea.vmem %s4, %s316
        %s318 = smul.u32 4, %s26
        %s319 = smul.u32 64, %s26
        %s320 = smul.u32 2, %s25
        %s321 = smul.u32 32, %s25
        %p322 = scmp.lt.s32.totalorder %s321, 63
        %s323 = scalar_select %p322, %s321, 63
        %s324 = smul.addr %s323, 8
        %s325 = scalar_lea.vmem %s3, %s324
        %s326 = smul.u32 32, %s25
        %p327 = scmp.lt.s32.totalorder %s25, 1
        %s328 = scalar_select %p327, %s25, 1
        %s329 = smul.addr %s328, 8
        %s330 = scalar_lea.vmem %s4, %s329
        %p331 = scmp.eq.s32.totalorder %s26, 0
        // Predicated region
        $region49: #{tpu_custom_call.1} parent=35 // pred_check
          %p332 = pneg %p331
        $region50: #{tpu_custom_call.1} parent=35 // pred_check_branch
          %334 = sbr.rel (%p332) target = $region52
        $region51: #{tpu_custom_call.1} parent=35 // pred_region
          %335 = vst [vmem:[#allocation2] sm:$0xff] 0.0
          %336 = vst [vmem:[#allocation2 + $0x8] sm:$0xff] 0.0
        $region52: #{tpu_custom_call.1} parent=35 // pred_fallthru
          _
        %v337 = vld [vmem:[#allocation2] sm:$0xff]
        %v338 = vld [vmem:[#allocation2 + $0x8] sm:$0xff]
        %v339 = vld [vmem:[%s261] sm:$0xff]
        %v340 = vld [vmem:[%s261 + $0x8] sm:$0xff]
        %v341 = vld [vmem:[%s270] sm:$0xff]
        %v342 = vld [vmem:[%s270 + $0x8] sm:$0xff]
        %v343 = vld [vmem:[%s270 + $0x10] sm:$0xff]
        %v344 = vld [vmem:[%s270 + $0x18] sm:$0xff]
        %v345 = vld [vmem:[%s270 + $0x20] sm:$0xff]
        %v346 = vld [vmem:[%s270 + $0x28] sm:$0xff]
        %v347 = vld [vmem:[%s270 + $0x30] sm:$0xff]
        %v348 = vld [vmem:[%s270 + $0x38] sm:$0xff]
        %v349 = vld [vmem:[%s270 + $0x40] sm:$0xff]
        %v350 = vld [vmem:[%s270 + $0x48] sm:$0xff]
        %v351 = vld [vmem:[%s270 + $0x50] sm:$0xff]
        %v352 = vld [vmem:[%s270 + $0x58] sm:$0xff]
        %v353 = vld [vmem:[%s270 + $0x60] sm:$0xff]
        %v354 = vld [vmem:[%s270 + $0x68] sm:$0xff]
        %v355 = vld [vmem:[%s270 + $0x70] sm:$0xff]
        %v356 = vld [vmem:[%s270 + $0x78] sm:$0xff]
        %v357 = vld [vmem:[%s270 + $0x80] sm:$0xff]
        %v358 = vld [vmem:[%s270 + $0x88] sm:$0xff]
        %v359 = vld [vmem:[%s270 + $0x90] sm:$0xff]
        %v360 = vld [vmem:[%s270 + $0x98] sm:$0xff]
        %v361 = vld [vmem:[%s270 + $0xa0] sm:$0xff]
        %v362 = vld [vmem:[%s270 + $0xa8] sm:$0xff]
        %v363 = vld [vmem:[%s270 + $0xb0] sm:$0xff]
        %v364 = vld [vmem:[%s270 + $0xb8] sm:$0xff]
        %v365 = vld [vmem:[%s270 + $0xc0] sm:$0xff]
        %v366 = vld [vmem:[%s270 + $0xc8] sm:$0xff]
        %v367 = vld [vmem:[%s270 + $0xd0] sm:$0xff]
        %v368 = vld [vmem:[%s270 + $0xd8] sm:$0xff]
        %v369 = vld [vmem:[%s270 + $0xe0] sm:$0xff]
        %v370 = vld [vmem:[%s270 + $0xe8] sm:$0xff]
        %v371 = vld [vmem:[%s270 + $0xf0] sm:$0xff]
        %v372 = vld [vmem:[%s270 + $0xf8] sm:$0xff]
        %v373 = vld [vmem:[%s270 + $0x100] sm:$0xff]
        %v374 = vld [vmem:[%s270 + $0x108] sm:$0xff]
        %v375 = vld [vmem:[%s270 + $0x110] sm:$0xff]
        %v376 = vld [vmem:[%s270 + $0x118] sm:$0xff]
        %v377 = vld [vmem:[%s270 + $0x120] sm:$0xff]
        %v378 = vld [vmem:[%s270 + $0x128] sm:$0xff]
        %v379 = vld [vmem:[%s270 + $0x130] sm:$0xff]
        %v380 = vld [vmem:[%s270 + $0x138] sm:$0xff]
        %v381 = vld [vmem:[%s270 + $0x140] sm:$0xff]
        %v382 = vld [vmem:[%s270 + $0x148] sm:$0xff]
        %v383 = vld [vmem:[%s270 + $0x150] sm:$0xff]
        %v384 = vld [vmem:[%s270 + $0x158] sm:$0xff]
        %v385 = vld [vmem:[%s270 + $0x160] sm:$0xff]
        %v386 = vld [vmem:[%s270 + $0x168] sm:$0xff]
        %v387 = vld [vmem:[%s270 + $0x170] sm:$0xff]
        %v388 = vld [vmem:[%s270 + $0x178] sm:$0xff]
        %v389 = vld [vmem:[%s270 + $0x180] sm:$0xff]
        %v390 = vld [vmem:[%s270 + $0x188] sm:$0xff]
        %v391 = vld [vmem:[%s270 + $0x190] sm:$0xff]
        %v392 = vld [vmem:[%s270 + $0x198] sm:$0xff]
        %v393 = vld [vmem:[%s270 + $0x1a0] sm:$0xff]
        %v394 = vld [vmem:[%s270 + $0x1a8] sm:$0xff]
        %v395 = vld [vmem:[%s270 + $0x1b0] sm:$0xff]
        %v396 = vld [vmem:[%s270 + $0x1b8] sm:$0xff]
        %v397 = vld [vmem:[%s270 + $0x1c0] sm:$0xff]
        %v398 = vld [vmem:[%s270 + $0x1c8] sm:$0xff]
        %v399 = vld [vmem:[%s270 + $0x1d0] sm:$0xff]
        %v400 = vld [vmem:[%s270 + $0x1d8] sm:$0xff]
        %v401 = vld [vmem:[%s270 + $0x1e0] sm:$0xff]
        %v402 = vld [vmem:[%s270 + $0x1e8] sm:$0xff]
        %v403 = vld [vmem:[%s270 + $0x1f0] sm:$0xff]
        %v404 = vld [vmem:[%s270 + $0x1f8] sm:$0xff]
        %v407 = vunpack.c.l.b16 %v339
        %v408 = vunpack.c.h.b16 %v339
        %v409 = vunpack.c.l.b16 %v340
        %v410 = vunpack.c.h.b16 %v340
        %v411 = vpack.c.b16 %v407, %v407
        %v412 = vpack.c.b16 %v408, %v408
        %v413 = vpack.c.b16 %v409, %v409
        %v414 = vpack.c.b16 %v410, %v410
        %v483 = vunpack.c.l.b16 %v341
        %v484 = vunpack.c.h.b16 %v341
        %v485 = vunpack.c.l.b16 %v342
        %v486 = vunpack.c.h.b16 %v342
        %v487 = vunpack.c.l.b16 %v343
        %v488 = vunpack.c.h.b16 %v343
        %v489 = vunpack.c.l.b16 %v344
        %v490 = vunpack.c.h.b16 %v344
        %v491 = vunpack.c.l.b16 %v345
        %v492 = vunpack.c.h.b16 %v345
        %v493 = vunpack.c.l.b16 %v346
        %v494 = vunpack.c.h.b16 %v346
        %v495 = vunpack.c.l.b16 %v347
        %v496 = vunpack.c.h.b16 %v347
        %v497 = vunpack.c.l.b16 %v348
        %v498 = vunpack.c.h.b16 %v348
        %v499 = vunpack.c.l.b16 %v349
        %v500 = vunpack.c.h.b16 %v349
        %v501 = vunpack.c.l.b16 %v350
        %v502 = vunpack.c.h.b16 %v350
        %v503 = vunpack.c.l.b16 %v351
        %v504 = vunpack.c.h.b16 %v351
        %v505 = vunpack.c.l.b16 %v352
        %v506 = vunpack.c.h.b16 %v352
        %v507 = vunpack.c.l.b16 %v353
        %v508 = vunpack.c.h.b16 %v353
        %v509 = vunpack.c.l.b16 %v354
        %v510 = vunpack.c.h.b16 %v354
        %v511 = vunpack.c.l.b16 %v355
        %v512 = vunpack.c.h.b16 %v355
        %v513 = vunpack.c.l.b16 %v356
        %v514 = vunpack.c.h.b16 %v356
        %v515 = vunpack.c.l.b16 %v357
        %v516 = vunpack.c.h.b16 %v357
        %v517 = vunpack.c.l.b16 %v358
        %v518 = vunpack.c.h.b16 %v358
        %v519 = vunpack.c.l.b16 %v359
        %v520 = vunpack.c.h.b16 %v359
        %v521 = vunpack.c.l.b16 %v360
        %v522 = vunpack.c.h.b16 %v360
        %v523 = vunpack.c.l.b16 %v361
        %v524 = vunpack.c.h.b16 %v361
        %v525 = vunpack.c.l.b16 %v362
        %v526 = vunpack.c.h.b16 %v362
        %v527 = vunpack.c.l.b16 %v363
        %v528 = vunpack.c.h.b16 %v363
        %v529 = vunpack.c.l.b16 %v364
        %v530 = vunpack.c.h.b16 %v364
        %v531 = vunpack.c.l.b16 %v365
        %v532 = vunpack.c.h.b16 %v365
        %v533 = vunpack.c.l.b16 %v366
        %v534 = vunpack.c.h.b16 %v366
        %v535 = vunpack.c.l.b16 %v367
        %v536 = vunpack.c.h.b16 %v367
        %v537 = vunpack.c.l.b16 %v368
        %v538 = vunpack.c.h.b16 %v368
        %v539 = vunpack.c.l.b16 %v369
        %v540 = vunpack.c.h.b16 %v369
        %v541 = vunpack.c.l.b16 %v370
        %v542 = vunpack.c.h.b16 %v370
        %v543 = vunpack.c.l.b16 %v371
        %v544 = vunpack.c.h.b16 %v371
        %v545 = vunpack.c.l.b16 %v372
        %v546 = vunpack.c.h.b16 %v372
        %v547 = vunpack.c.l.b16 %v373
        %v548 = vunpack.c.h.b16 %v373
        %v549 = vunpack.c.l.b16 %v374
        %v550 = vunpack.c.h.b16 %v374
        %v551 = vunpack.c.l.b16 %v375
        %v552 = vunpack.c.h.b16 %v375
        %v553 = vunpack.c.l.b16 %v376
        %v554 = vunpack.c.h.b16 %v376
        %v555 = vunpack.c.l.b16 %v377
        %v556 = vunpack.c.h.b16 %v377
        %v557 = vunpack.c.l.b16 %v378
        %v558 = vunpack.c.h.b16 %v378
        %v559 = vunpack.c.l.b16 %v379
        %v560 = vunpack.c.h.b16 %v379
        %v561 = vunpack.c.l.b16 %v380
        %v562 = vunpack.c.h.b16 %v380
        %v563 = vunpack.c.l.b16 %v381
        %v564 = vunpack.c.h.b16 %v381
        %v565 = vunpack.c.l.b16 %v382
        %v566 = vunpack.c.h.b16 %v382
        %v567 = vunpack.c.l.b16 %v383
        %v568 = vunpack.c.h.b16 %v383
        %v569 = vunpack.c.l.b16 %v384
        %v570 = vunpack.c.h.b16 %v384
        %v571 = vunpack.c.l.b16 %v385
        %v572 = vunpack.c.h.b16 %v385
        %v573 = vunpack.c.l.b16 %v386
        %v574 = vunpack.c.h.b16 %v386
        %v575 = vunpack.c.l.b16 %v387
        %v576 = vunpack.c.h.b16 %v387
        %v577 = vunpack.c.l.b16 %v388
        %v578 = vunpack.c.h.b16 %v388
        %v579 = vunpack.c.l.b16 %v389
        %v580 = vunpack.c.h.b16 %v389
        %v581 = vunpack.c.l.b16 %v390
        %v582 = vunpack.c.h.b16 %v390
        %v583 = vunpack.c.l.b16 %v391
        %v584 = vunpack.c.h.b16 %v391
        %v585 = vunpack.c.l.b16 %v392
        %v586 = vunpack.c.h.b16 %v392
        %v587 = vunpack.c.l.b16 %v393
        %v588 = vunpack.c.h.b16 %v393
        %v589 = vunpack.c.l.b16 %v394
        %v590 = vunpack.c.h.b16 %v394
        %v591 = vunpack.c.l.b16 %v395
        %v592 = vunpack.c.h.b16 %v395
        %v593 = vunpack.c.l.b16 %v396
        %v594 = vunpack.c.h.b16 %v396
        %v595 = vunpack.c.l.b16 %v397
        %v596 = vunpack.c.h.b16 %v397
        %v597 = vunpack.c.l.b16 %v398
        %v598 = vunpack.c.h.b16 %v398
        %v599 = vunpack.c.l.b16 %v399
        %v600 = vunpack.c.h.b16 %v399
        %v601 = vunpack.c.l.b16 %v400
        %v602 = vunpack.c.h.b16 %v400
        %v603 = vunpack.c.l.b16 %v401
        %v604 = vunpack.c.h.b16 %v401
        %v605 = vunpack.c.l.b16 %v402
        %v606 = vunpack.c.h.b16 %v402
        %v607 = vunpack.c.l.b16 %v403
        %v608 = vunpack.c.h.b16 %v403
        %v609 = vunpack.c.l.b16 %v404
        %v610 = vunpack.c.h.b16 %v404
        %v611 = vpack.c.b16 %v485, %v483
        %v612 = vpack.c.b16 %v486, %v484
        %v613 = vpack.c.b16 %v489, %v487
        %v614 = vpack.c.b16 %v490, %v488
        %v615 = vpack.c.b16 %v493, %v491
        %v616 = vpack.c.b16 %v494, %v492
        %v617 = vpack.c.b16 %v497, %v495
        %v618 = vpack.c.b16 %v498, %v496
        %v619 = vpack.c.b16 %v501, %v499
        %v620 = vpack.c.b16 %v502, %v500
        %v621 = vpack.c.b16 %v505, %v503
        %v622 = vpack.c.b16 %v506, %v504
        %v623 = vpack.c.b16 %v509, %v507
        %v624 = vpack.c.b16 %v510, %v508
        %v625 = vpack.c.b16 %v513, %v511
        %v626 = vpack.c.b16 %v514, %v512
        %v627 = vpack.c.b16 %v517, %v515
        %v628 = vpack.c.b16 %v518, %v516
        %v629 = vpack.c.b16 %v521, %v519
        %v630 = vpack.c.b16 %v522, %v520
        %v631 = vpack.c.b16 %v525, %v523
        %v632 = vpack.c.b16 %v526, %v524
        %v633 = vpack.c.b16 %v529, %v527
        %v634 = vpack.c.b16 %v530, %v528
        %v635 = vpack.c.b16 %v533, %v531
        %v636 = vpack.c.b16 %v534, %v532
        %v637 = vpack.c.b16 %v537, %v535
        %v638 = vpack.c.b16 %v538, %v536
        %v639 = vpack.c.b16 %v541, %v539
        %v640 = vpack.c.b16 %v542, %v540
        %v641 = vpack.c.b16 %v545, %v543
        %v642 = vpack.c.b16 %v546, %v544
        %v643 = vpack.c.b16 %v549, %v547
        %v644 = vpack.c.b16 %v550, %v548
        %v645 = vpack.c.b16 %v553, %v551
        %v646 = vpack.c.b16 %v554, %v552
        %v647 = vpack.c.b16 %v557, %v555
        %v648 = vpack.c.b16 %v558, %v556
        %v649 = vpack.c.b16 %v561, %v559
        %v650 = vpack.c.b16 %v562, %v560
        %v651 = vpack.c.b16 %v565, %v563
        %v652 = vpack.c.b16 %v566, %v564
        %v653 = vpack.c.b16 %v569, %v567
        %v654 = vpack.c.b16 %v570, %v568
        %v655 = vpack.c.b16 %v573, %v571
        %v656 = vpack.c.b16 %v574, %v572
        %v657 = vpack.c.b16 %v577, %v575
        %v658 = vpack.c.b16 %v578, %v576
        %v659 = vpack.c.b16 %v581, %v579
        %v660 = vpack.c.b16 %v582, %v580
        %v661 = vpack.c.b16 %v585, %v583
        %v662 = vpack.c.b16 %v586, %v584
        %v663 = vpack.c.b16 %v589, %v587
        %v664 = vpack.c.b16 %v590, %v588
        %v665 = vpack.c.b16 %v593, %v591
        %v666 = vpack.c.b16 %v594, %v592
        %v667 = vpack.c.b16 %v597, %v595
        %v668 = vpack.c.b16 %v598, %v596
        %v669 = vpack.c.b16 %v601, %v599
        %v670 = vpack.c.b16 %v602, %v600
        %v671 = vpack.c.b16 %v605, %v603
        %v672 = vpack.c.b16 %v606, %v604
        %v673 = vpack.c.b16 %v609, %v607
        %v674 = vpack.c.b16 %v610, %v608
        %739 = vmatprep.subr.bf16.mxu0 %v612
        %740 = vmatpush1.bf16.msra.mxu0 %v611
        %741 = vmatprep.subr.bf16.mxu0 %v614
        %742 = vmatpush1.bf16.msra.mxu0 %v613
        %743 = vmatprep.subr.bf16.mxu0 %v616
        %744 = vmatpush1.bf16.msra.mxu0 %v615
        %745 = vmatprep.subr.bf16.mxu0 %v618
        %746 = vmatpush1.bf16.msra.mxu0 %v617
        %747 = vmatprep.subr.bf16.mxu0 %v620
        %748 = vmatpush1.bf16.msra.mxu0 %v619
        %749 = vmatprep.subr.bf16.mxu0 %v622
        %750 = vmatpush1.bf16.msra.mxu0 %v621
        %751 = vmatprep.subr.bf16.mxu0 %v624
        %752 = vmatpush1.bf16.msra.mxu0 %v623
        %753 = vmatprep.subr.bf16.mxu0 %v626
        %754 = vmatpush1.bf16.msra.mxu0 %v625
        %755 = vmatprep.subr.bf16.mxu0 %v628
        %756 = vmatpush1.bf16.msra.mxu0 %v627
        %757 = vmatprep.subr.bf16.mxu0 %v630
        %758 = vmatpush1.bf16.msra.mxu0 %v629
        %759 = vmatprep.subr.bf16.mxu0 %v632
        %760 = vmatpush1.bf16.msra.mxu0 %v631
        %761 = vmatprep.subr.bf16.mxu0 %v634
        %762 = vmatpush1.bf16.msra.mxu0 %v633
        %763 = vmatprep.subr.bf16.mxu0 %v636
        %764 = vmatpush1.bf16.msra.mxu0 %v635
        %765 = vmatprep.subr.bf16.mxu0 %v638
        %766 = vmatpush1.bf16.msra.mxu0 %v637
        %767 = vmatprep.subr.bf16.mxu0 %v640
        %768 = vmatpush1.bf16.msra.mxu0 %v639
        %769 = vmatprep.subr.bf16.mxu0 %v642
        %770 = vmatpush1.bf16.msra.mxu0 %v641
        %771 = vmatprep.mubr.bf16.mxu0 %v412
        %772 = vmatmul.mubr.bf16.gmra.mrb[0].mxu0 %v411
        %v773 = vpop.f32.mrb[0].mxu0
        %v774 = vadd.f32 0.0, %v773
        %v775 = vpop.f32.mrb[0].mxu0
        %v776 = vadd.f32 0.0, %v775
        %v777 = vpop.f32.mrb[0].mxu0
        %v778 = vpop.f32.mrb[0].mxu0
        %779 = vdwg.mxu0
        %780 = vmatprep.subr.bf16.mxu0 %v644
        %781 = vmatpush1.bf16.msra.mxu0 %v643
        %782 = vmatprep.subr.bf16.mxu0 %v646
        %783 = vmatpush1.bf16.msra.mxu0 %v645
        %784 = vmatprep.subr.bf16.mxu0 %v648
        %785 = vmatpush1.bf16.msra.mxu0 %v647
        %786 = vmatprep.subr.bf16.mxu0 %v650
        %787 = vmatpush1.bf16.msra.mxu0 %v649
        %788 = vmatprep.subr.bf16.mxu0 %v652
        %789 = vmatpush1.bf16.msra.mxu0 %v651
        %790 = vmatprep.subr.bf16.mxu0 %v654
        %791 = vmatpush1.bf16.msra.mxu0 %v653
        %792 = vmatprep.subr.bf16.mxu0 %v656
        %793 = vmatpush1.bf16.msra.mxu0 %v655
        %794 = vmatprep.subr.bf16.mxu0 %v658
        %795 = vmatpush1.bf16.msra.mxu0 %v657
        %796 = vmatprep.subr.bf16.mxu0 %v660
        %797 = vmatpush1.bf16.msra.mxu0 %v659
        %798 = vmatprep.subr.bf16.mxu0 %v662
        %799 = vmatpush1.bf16.msra.mxu0 %v661
        %800 = vmatprep.subr.bf16.mxu0 %v664
        %801 = vmatpush1.bf16.msra.mxu0 %v663
        %802 = vmatprep.subr.bf16.mxu0 %v666
        %803 = vmatpush1.bf16.msra.mxu0 %v665
        %804 = vmatprep.subr.bf16.mxu0 %v668
        %805 = vmatpush1.bf16.msra.mxu0 %v667
        %806 = vmatprep.subr.bf16.mxu0 %v670
        %807 = vmatpush1.bf16.msra.mxu0 %v669
        %808 = vmatprep.subr.bf16.mxu0 %v672
        %809 = vmatpush1.bf16.msra.mxu0 %v671
        %810 = vmatprep.subr.bf16.mxu0 %v674
        %811 = vmatpush1.bf16.msra.mxu0 %v673
        %812 = vmatprep.mubr.bf16.mxu0 %v414
        %813 = vmatmul.mubr.bf16.gmra.mrb[0].mxu0 %v413
        %v814 = vpop.f32.mrb[0].mxu0
        %v815 = vadd.f32 %v774, %v814
        %v816 = vpop.f32.mrb[0].mxu0
        %v817 = vadd.f32 %v776, %v816
        %v818 = vpop.f32.mrb[0].mxu0
        %v819 = vpop.f32.mrb[0].mxu0
        %820 = vdwg.mxu0
        %v821 = vadd.f32 %v337, %v815
        %v822 = vadd.f32 %v338, %v817
        %823 = vst [vmem:[#allocation2] sm:$0xff] %v821
        %824 = vst [vmem:[#allocation2 + $0x8] sm:$0xff] %v822
        %p825 = scmp.eq.s32.totalorder %s26, 2
        // Predicated region
        $region53: #{tpu_custom_call.1} parent=35 // pred_check
          %p826 = pneg %p825
        $region54: #{tpu_custom_call.1} parent=35 // pred_check_branch
          %828 = sbr.rel (%p826) target = $region56
        $region55: #{tpu_custom_call.1} parent=35 // pred_region
          %v829 = vld [vmem:[#allocation2] sm:$0xff]
          %v830 = vld [vmem:[#allocation2 + $0x8] sm:$0xff]
          %v831 = vld [vmem:[%s279] sm:$0x3]
          %v833 = vlaneseq
          %v834 = vshrl.u32 %v833, 7
          %v835 = vsub.s32 0, %v834
          %v836 = vrot.slane %v831, %v835
          %v837 = vlaneseq
          %v838 = vshrl.u32 %v837, 7
          %v839 = vsub.s32 1, %v838
          %v840 = vrot.slane %v831, %v839
          %v843 = vadd.f32 %v829, %v836
          %v844 = vadd.f32 %v830, %v840
          %v845 = vmax.f32 %v843, 0.0
          %v846 = vmax.f32 %v844, 0.0
          %v847 = vld [vmem:[%s325] sm:$0xff]
          %v848 = vld [vmem:[%s325 + $0x8] sm:$0xff]
          %v849 = vld [vmem:[%s325 + $0x10] sm:$0xff]
          %v850 = vld [vmem:[%s325 + $0x18] sm:$0xff]
          %v851 = vld [vmem:[%s325 + $0x20] sm:$0xff]
          %v852 = vld [vmem:[%s325 + $0x28] sm:$0xff]
          %v853 = vld [vmem:[%s325 + $0x30] sm:$0xff]
          %v854 = vld [vmem:[%s325 + $0x38] sm:$0xff]
          %v855 = vld [vmem:[%s325 + $0x40] sm:$0xff]
          %v856 = vld [vmem:[%s325 + $0x48] sm:$0xff]
          %v857 = vld [vmem:[%s325 + $0x50] sm:$0xff]
          %v858 = vld [vmem:[%s325 + $0x58] sm:$0xff]
          %v859 = vld [vmem:[%s325 + $0x60] sm:$0xff]
          %v860 = vld [vmem:[%s325 + $0x68] sm:$0xff]
          %v861 = vld [vmem:[%s325 + $0x70] sm:$0xff]
          %v862 = vld [vmem:[%s325 + $0x78] sm:$0xff]
          %v863 = vld [vmem:[%s325 + $0x80] sm:$0xff]
          %v864 = vld [vmem:[%s325 + $0x88] sm:$0xff]
          %v865 = vld [vmem:[%s325 + $0x90] sm:$0xff]
          %v866 = vld [vmem:[%s325 + $0x98] sm:$0xff]
          %v867 = vld [vmem:[%s325 + $0xa0] sm:$0xff]
          %v868 = vld [vmem:[%s325 + $0xa8] sm:$0xff]
          %v869 = vld [vmem:[%s325 + $0xb0] sm:$0xff]
          %v870 = vld [vmem:[%s325 + $0xb8] sm:$0xff]
          %v871 = vld [vmem:[%s325 + $0xc0] sm:$0xff]
          %v872 = vld [vmem:[%s325 + $0xc8] sm:$0xff]
          %v873 = vld [vmem:[%s325 + $0xd0] sm:$0xff]
          %v874 = vld [vmem:[%s325 + $0xd8] sm:$0xff]
          %v875 = vld [vmem:[%s325 + $0xe0] sm:$0xff]
          %v876 = vld [vmem:[%s325 + $0xe8] sm:$0xff]
          %v877 = vld [vmem:[%s325 + $0xf0] sm:$0xff]
          %v878 = vld [vmem:[%s325 + $0xf8] sm:$0xff]
          %879 = vmatprep.subr.mxu0 0.0
          %880 = vmatpush1.msra.mxu0 %v847
          %881 = vmatprep.subr.mxu0 0.0
          %882 = vmatpush1.msra.mxu0 %v848
          %883 = vmatprep.subr.mxu0 0.0
          %884 = vmatpush1.msra.mxu0 %v849
          %885 = vmatprep.subr.mxu0 0.0
          %886 = vmatpush1.msra.mxu0 %v850
          %887 = vmatprep.subr.mxu0 0.0
          %888 = vmatpush1.msra.mxu0 %v851
          %889 = vmatprep.subr.mxu0 0.0
          %890 = vmatpush1.msra.mxu0 %v852
          %891 = vmatprep.subr.mxu0 0.0
          %892 = vmatpush1.msra.mxu0 %v853
          %893 = vmatprep.subr.mxu0 0.0
          %894 = vmatpush1.msra.mxu0 %v854
          %895 = vmatprep.subr.mxu0 0.0
          %896 = vmatpush1.msra.mxu0 %v855
          %897 = vmatprep.subr.mxu0 0.0
          %898 = vmatpush1.msra.mxu0 %v856
          %899 = vmatprep.subr.mxu0 0.0
          %900 = vmatpush1.msra.mxu0 %v857
          %901 = vmatprep.subr.mxu0 0.0
          %902 = vmatpush1.msra.mxu0 %v858
          %903 = vmatprep.subr.mxu0 0.0
          %904 = vmatpush1.msra.mxu0 %v859
          %905 = vmatprep.subr.mxu0 0.0
          %906 = vmatpush1.msra.mxu0 %v860
          %907 = vmatprep.subr.mxu0 0.0
          %908 = vmatpush1.msra.mxu0 %v861
          %909 = vmatprep.subr.mxu0 0.0
          %910 = vmatpush1.msra.mxu0 %v862
          %911 = vmatprep.subr.mxu0 0.0
          %912 = vmatpush1.msra.mxu0 %v863
          %913 = vmatprep.subr.mxu0 0.0
          %914 = vmatpush1.msra.mxu0 %v864
          %915 = vmatprep.subr.mxu0 0.0
          %916 = vmatpush1.msra.mxu0 %v865
          %917 = vmatprep.subr.mxu0 0.0
          %918 = vmatpush1.msra.mxu0 %v866
          %919 = vmatprep.subr.mxu0 0.0
          %920 = vmatpush1.msra.mxu0 %v867
          %921 = vmatprep.subr.mxu0 0.0
          %922 = vmatpush1.msra.mxu0 %v868
          %923 = vmatprep.subr.mxu0 0.0
          %924 = vmatpush1.msra.mxu0 %v869
          %925 = vmatprep.subr.mxu0 0.0
          %926 = vmatpush1.msra.mxu0 %v870
          %927 = vmatprep.subr.mxu0 0.0
          %928 = vmatpush1.msra.mxu0 %v871
          %929 = vmatprep.subr.mxu0 0.0
          %930 = vmatpush1.msra.mxu0 %v872
          %931 = vmatprep.subr.mxu0 0.0
          %932 = vmatpush1.msra.mxu0 %v873
          %933 = vmatprep.subr.mxu0 0.0
          %934 = vmatpush1.msra.mxu0 %v874
          %935 = vmatprep.subr.mxu0 0.0
          %936 = vmatpush1.msra.mxu0 %v875
          %937 = vmatprep.subr.mxu0 0.0
          %938 = vmatpush1.msra.mxu0 %v876
          %939 = vmatprep.subr.mxu0 0.0
          %940 = vmatpush1.msra.mxu0 %v877
          %941 = vmatprep.subr.mxu0 0.0
          %942 = vmatpush1.msra.mxu0 %v878
          %943 = vmatprep.mubr.f32.mxu0 %v846
          %944 = vmatmul.mubr.f32.gmra.mrb[0].mxu0 %v845
          %v945 = vpop.f32.mrb[0].mxu0
          %v946 = vadd.f32 0.0, %v945
          %v947 = vpop.f32.mrb[0].mxu0
          %948 = vdwg.mxu0
          %vm949 = vcmask 15360
          %950 = vst.msk [vmem:[%s330] sm:$0xff] %vm949, %v946
        $region56: #{tpu_custom_call.1} parent=35 // pred_fallthru
          _
        %p951 = scmp.lt.s32.totalorder %s25, 1
        %s952 = scalar_select %p951, %s25, 1
        %s953 = smul.addr %s952, 8
        %s954 = scalar_lea.vmem %s4, %s953
        // Predicated region
        $region57: #{tpu_custom_call.1} parent=35 // pred_check
          %p955 = pneg %p157
        $region58: #{tpu_custom_call.1} parent=35 // pred_check_branch
          %957 = sbr.rel (%p955) target = $region60
        $region59: #{tpu_custom_call.1} parent=35 // pred_region
          _
        $region60: #{tpu_custom_call.1} parent=35 // pred_fallthru
          _
      $region36: #{tpu_custom_call.1} parent=5 // pred_fallthru
        _
      %p958 = scmp.le.s32.totalorder 2, %s16
      // Predicated region
      $region61: #{tpu_custom_call.1} parent=5 // pred_check
        %p959 = pneg %p958
      $region62: #{tpu_custom_call.1} parent=5 // pred_check_branch
        %961 = sbr.rel (%p959) target = $region64
      $region63: #{tpu_custom_call.1} parent=5 // pred_region
        %s962 = ssub.s32 %s16, 2
        // Predicated region
        $region65: #{tpu_custom_call.1} parent=63 // pred_check
          %p963 = pneg %p163
        $region66: #{tpu_custom_call.1} parent=63 // pred_check_branch
          %965 = sbr.rel (%p963) target = $region68
        $region67: #{tpu_custom_call.1} parent=63 // pred_region
          %p966 = scmp.lt.s32.totalorder %s27, 1
          %s967 = scalar_select %p966, %s27, 1
          %s968 = smul.addr %s967, 8
          %s969 = scalar_lea.vmem %s4, %s968
        $region68: #{tpu_custom_call.1} parent=63 // pred_fallthru
          _
      $region64: #{tpu_custom_call.1} parent=5 // pred_fallthru
        _
    $region6: #{tpu_custom_call.1} parent=1 // loop_footer
      %s20 = sadd.s32 1, %s16
    $region7: #{tpu_custom_call.1} parent=1 // loop_footer_branch
      %15 = sbr.rel target = $region3
    $region8: #{tpu_custom_call.1} parent=1 // loop_exit
      _
    %970 = vsyncpa [#allocation4], 1
    %s971 = scalar_lea.sflag [#allocation4], 1
    %972 = vsyncpa %s971, 1
    %973 = vsyncpa [#allocation6], 1
    %s974 = scalar_lea.sflag [#allocation6], 1
    %975 = vsyncpa %s974, 1

</llo_original>
